<compile_context>
chip_gen: v7x
topology: tpu7x:2x2x1
jax: 0.10.0
libtpu: 0.0.40
codegen_flags: <defaults>
</compile_context>

<pallas_src>
import functools
import math

import jax
import jax.numpy as jnp
from jax import lax
from jax.experimental import pallas as pl
from jax.experimental.pallas import tpu as pltpu


# ---------------------------------------------------------------------------
# Hardware-aware budgeting helpers
# ---------------------------------------------------------------------------

def _vmem_budget_bytes() -> int:
    """VMEM budget with headroom (v5e/v6e: 128 MiB, v7x: 64 MiB physical)."""
    cap = 64 * 1024 * 1024          # conservative default (v7x physical VMEM)
    try:
        cap = int(getattr(pltpu.get_tpu_info(), "vmem_capacity_bytes", cap))
    except Exception:               # interpret mode / older runtimes
        pass
    return (3 * cap) // 4           # leave headroom for compiler scratch


def _compiler_params(vmem_limit_bytes: int):
    try:
        return pltpu.CompilerParams(dimension_semantics=("parallel",),
                                    vmem_limit_bytes=int(vmem_limit_bytes))
    except TypeError:               # very old CompilerParams without the field
        return pltpu.CompilerParams(dimension_semantics=("parallel",))


def _pick_batch_tile(batch: int, bytes_per_batch_elem: int,
                     target_tile_bytes: int) -> int:
    """Whole batch elements per grid step.

    Byte-sized (not a fixed row count).  Constrained so every (TB*S, x) block
    satisfies the (8, 128) layout rule: TB == batch or TB % 8 == 0.  Prefers a
    choice that yields >= 2 grid steps so the 'parallel' axis can split across
    the two v7x TensorCores.
    """
    cands = [tb for tb in range(1, batch + 1)
             if batch % tb == 0 and (tb == batch or tb % 8 == 0)]
    within = [tb for tb in cands if tb * bytes_per_batch_elem <= target_tile_bytes]
    multi = [tb for tb in within if tb < batch]     # >= 2 grid steps
    if multi:
        return max(multi)
    if within:
        return max(within)
    return min(cands)


def _pick_chunk_batches(batch_tile: int, seq_len: int, dim: int, itemsize: int,
                        target_chunk_bytes: int = 1 << 20) -> int:
    """Batch elements per DMA chunk inside one grid step (divisor of batch_tile).

    Prefer >= 2 chunks so chunk k+1's gathers overlap chunk k's pos-add/stores,
    and cap chunk bytes so the in-flight descriptor count stays bounded.
    """
    row_bytes = seq_len * dim * itemsize
    cands = [cb for cb in range(1, batch_tile + 1) if batch_tile % cb == 0]
    within = [cb for cb in cands
              if cb < batch_tile and cb * row_bytes <= target_chunk_bytes]
    return max(within) if within else 1


# ---------------------------------------------------------------------------
# Path A: VMEM-resident table, one-hot MXU gather (small vocab)
# ---------------------------------------------------------------------------

def _resident_embedding_kernel(idx_ref, emb_ref, pos_ref, out_ref, *,
                               batch_tile, seq_len, vocab):
    # idx_ref: (ROWS, 1) int32   emb_ref: (V, D)   pos_ref: (S, D)
    # out_ref: (ROWS, D) with ROWS = batch_tile * seq_len
    rows = batch_tile * seq_len
    # torch.nn.Embedding raises on out-of-range ids; clamp instead (vector op).
    ids = jnp.clip(idx_ref[...], 0, vocab - 1)                       # (ROWS, 1)
    iota = lax.broadcasted_iota(jnp.int32, (rows, vocab), 1)          # (ROWS, V)
    onehot = (iota == ids).astype(emb_ref.dtype)                      # (ROWS, V)
    # Gather as a one-hot MXU matmul: reads the table from VMEM, never HBM.
    # (MXU f32 matmul may run via bf16 passes; exact up to ~1e-3 abs.)
    gathered = jnp.dot(onehot, emb_ref[...],
                       preferred_element_type=jnp.float32)            # (ROWS, D)
    pos = pos_ref[...]
    # Positional add per (S, D) batch sub-slice: implicit batch broadcast,
    # no jnp.tile temporary.
    for b in range(batch_tile):                                       # static
        sl = pl.ds(b * seq_len, seq_len)
        out_ref[sl, :] = (gathered[b * seq_len:(b + 1) * seq_len, :]
                          + pos).astype(out_ref.dtype)


def _forward_resident(x_idx, emb, pos, batch_tile, vmem_limit):
    B, S = x_idx.shape
    V, D = emb.shape
    rows = batch_tile * S
    num_tiles = B // batch_tile
    idx2d = x_idx.reshape(B * S, 1).astype(jnp.int32)

    kernel = functools.partial(_resident_embedding_kernel,
                               batch_tile=batch_tile, seq_len=S, vocab=V)
    out_flat = pl.pallas_call(
        kernel,
        out_shape=jax.ShapeDtypeStruct((B * S, D), emb.dtype),
        grid_spec=pltpu.PrefetchScalarGridSpec(
            num_scalar_prefetch=0,
            grid=(num_tiles,),
            in_specs=[
                pl.BlockSpec((rows, 1), lambda t: (t, 0)),   # token ids
                pl.BlockSpec((V, D), lambda t: (0, 0)),      # resident table
                pl.BlockSpec((S, D), lambda t: (0, 0)),      # resident pos
            ],
            out_specs=pl.BlockSpec((rows, D), lambda t: (t, 0)),
        ),
        compiler_params=_compiler_params(vmem_limit),
    )(idx2d, emb, pos)
    # TODO(synk): for D < 128 a lane-dense output slab (folding 128//D rows
    # into the lane dim) would avoid masked vst; kept (ROWS, D) for simplicity.
    return out_flat.reshape(B, S, D)


# ---------------------------------------------------------------------------
# Path B: table stays in HBM, chunked row-gather straight into out_ref
# ---------------------------------------------------------------------------

def _hbm_gather_kernel(idx_ref, emb_hbm, pos_ref, out_ref, copy_sems, *,
                       batch_tile, seq_len, chunk_batches):
    # idx_ref:   (B*S,) int32 SMEM (scalar prefetch), pre-clamped in wrapper
    # emb_hbm:   (V, D) ref left in HBM (memory_space=pl.ANY)
    # pos_ref:   (S, D) VMEM
    # out_ref:   (ROWS, D) pipelined output block -- gathers land here directly
    # copy_sems: (2,) DMA semaphores, one per in-flight chunk
    rows = batch_tile * seq_len
    chunk_rows = chunk_batches * seq_len
    n_chunks = batch_tile // chunk_batches
    tile_base = pl.program_id(0) * rows
    unroll = next(u for u in (8, 4, 2, 1) if chunk_rows % u == 0)

    def issue_chunk(c):
        # All row gathers of a chunk signal ONE shared DMA semaphore; they are
        # retired by a single byte-counted wait in wait_chunk.
        sem = copy_sems.at[c % 2]
        chunk_base = c * chunk_rows

        @pl.loop(0, chunk_rows // unroll)
        def _issue(i):
            r0 = chunk_base + i * unroll
            for u in range(unroll):                 # static unroll of the
                r = r0 + u                          # descriptor-issue loop
                tok = idx_ref[tile_base + r]        # SMEM scalar read
                pltpu.make_async_copy(
                    emb_hbm.at[pl.ds(tok, 1), :],
                    out_ref.at[pl.ds(r, 1), :],     # gather lands in out block
                    sem,
                ).start()

    def wait_chunk(c):
        # Single wait whose descriptor byte count equals the sum of the
        # chunk's row copies (DMA semaphores count bytes).
        chunk_view = out_ref.at[pl.ds(c * chunk_rows, chunk_rows), :]
        pltpu.make_async_copy(chunk_view, chunk_view, copy_sems.at[c % 2]).wait()

    issue_chunk(0)
    for c in range(n_chunks):                       # static; 2 chunks in flight
        if c + 1 < n_chunks:
            issue_chunk(c + 1)                      # overlap next chunk's DMAs
        wait_chunk(c)
        # Positional add in place on the output block, one (S, D) batch
        # sub-slice at a time (implicit batch broadcast, no jnp.tile temp).
        for b in range(chunk_batches):              # static
            row0 = (c * chunk_batches + b) * seq_len
            sl = pl.ds(row0, seq_len)
            out_ref[sl, :] = (out_ref[sl, :] + pos_ref[...]).astype(out_ref.dtype)


def _forward_hbm_gather(x_idx, emb, pos, batch_tile, vmem_limit):
    B, S = x_idx.shape
    V, D = emb.shape
    itemsize = emb.dtype.itemsize
    rows = batch_tile * S
    num_tiles = B // batch_tile
    chunk_batches = _pick_chunk_batches(batch_tile, S, D, itemsize)
    # Clamp once in the wrapper (vectorized) so the per-row scalar issue loop
    # inside the kernel stays as tight as possible.
    idx_flat = jnp.clip(x_idx.reshape(-1).astype(jnp.int32), 0, V - 1)

    kernel = functools.partial(_hbm_gather_kernel, batch_tile=batch_tile,
                               seq_len=S, chunk_batches=chunk_batches)
    out_flat = pl.pallas_call(
        kernel,
        out_shape=jax.ShapeDtypeStruct((B * S, D), emb.dtype),
        grid_spec=pltpu.PrefetchScalarGridSpec(
            num_scalar_prefetch=1,                   # token ids -> SMEM
            grid=(num_tiles,),
            in_specs=[
                pl.BlockSpec(memory_space=pl.ANY),               # emb in HBM
                # TODO(synk): for very large S*D, switch to a 2-D
                # (batch-tile, seq-chunk) grid so only a (TS, D) pos slice is
                # VMEM-resident per step.
                pl.BlockSpec((S, D), lambda t, idx: (0, 0)),     # resident pos
            ],
            out_specs=pl.BlockSpec((rows, D), lambda t, idx: (t, 0)),
            scratch_shapes=[
                pltpu.SemaphoreType.DMA((2,)),       # one sem per in-flight chunk
            ],
        ),
        compiler_params=_compiler_params(vmem_limit),
    )(idx_flat, emb, pos)
    return out_flat.reshape(B, S, D)


# ---------------------------------------------------------------------------
# Dispatch
# ---------------------------------------------------------------------------

_ONE_HOT_MAX_VOCAB = 2048           # beyond this the one-hot matmul is wasteful


def embedding_forward(x_idx, emb, pos, *, target_tile_bytes: int = 4 << 20):
    B, S = x_idx.shape
    V, D = emb.shape
    assert pos.shape == (S, D)
    itemsize = emb.dtype.itemsize

    budget = _vmem_budget_bytes()
    tile_budget = min(target_tile_bytes, budget // 8)
    table_bytes = V * D * itemsize
    pos_bytes = S * D * itemsize

    if V <= _ONE_HOT_MAX_VOCAB:
        # bytes/batch-elem in the resident kernel: onehot (V) + gathered + out (2D)
        tb = _pick_batch_tile(B, S * (V + 2 * D) * itemsize, tile_budget)
        tile_bytes = tb * S * (V + 2 * D) * itemsize
        if 2 * (table_bytes + pos_bytes) + 2 * tile_bytes <= budget:
            return _forward_resident(x_idx, emb, pos, tb, budget)

    tb = _pick_batch_tile(B, 2 * S * D * itemsize, tile_budget)
    return _forward_hbm_gather(x_idx, emb, pos, tb, budget)


# ---------------------------------------------------------------------------
# Parameter construction (mirrors EmbeddingLayer._init_parameters)
# ---------------------------------------------------------------------------

def make_positional_encoding(sequence_length: int, latent_dim: int) -> jnp.ndarray:
    S, D = sequence_length, latent_dim
    pos_ids = jnp.arange(S, dtype=jnp.float32)[:, None]          # (S, 1)
    emb_ids = jnp.arange(D, dtype=jnp.float32)[None, :]          # (1, D)
    emb_tmp = pos_ids / (10000.0 ** (2.0 * emb_ids / D))         # (S, D)
    even_len = D // 2 + D % 2
    odd_len = D // 2
    even_pos = jnp.sin(emb_tmp)[:, :even_len]
    odd_pos = jnp.cos(emb_tmp)[:, :odd_len]
    out = jnp.zeros((S, D), jnp.float32)
    out = out.at[:, jnp.arange(even_len) * 2].set(even_pos)
    out = out.at[:, jnp.arange(odd_len) * 2 + 1].set(odd_pos)
    return out


def make_embedding_table(key, num_embeddings: int, latent_dim: int) -> jnp.ndarray:
    # torch.nn.init.xavier_uniform_: U(-a, a), a = sqrt(6 / (fan_in + fan_out))
    bound = math.sqrt(6.0 / (num_embeddings + latent_dim))
    return jax.random.uniform(key, (num_embeddings, latent_dim),
                              minval=-bound, maxval=bound, dtype=jnp.float32)


if __name__ == "__main__":
    NUM_EMBEDDINGS = 16   # vocabulary size
    SEQ_LEN = 8
    LATENT_DIM = 32
    BATCH = 2

    key = jax.random.PRNGKey(0)
    k_emb, k_idx = jax.random.split(key)

    emb = make_embedding_table(k_emb, NUM_EMBEDDINGS, LATENT_DIM)
    pos = make_positional_encoding(SEQ_LEN, LATENT_DIM)
    x_idx = jax.random.randint(
        k_idx, (BATCH, SEQ_LEN), 0, NUM_EMBEDDINGS, dtype=jnp.int32)

    out = embedding_forward(x_idx, emb, pos)
    out = jax.block_until_ready(out)

    # Pure-JAX reference.  Tolerance covers the MXU's f32-via-bf16-pass matmul
    # used by the one-hot gather (abs error <= ~1e-3 for these magnitudes).
    ref = emb[x_idx] + pos[None, :, :]
    assert out.shape == (BATCH, SEQ_LEN, LATENT_DIM)
    assert out.dtype == jnp.float32
    assert jnp.allclose(out, ref, atol=2e-3, rtol=2e-3), "mismatch vs reference"

    print("KERNEL_OK")
</pallas_src>

<mosaic_0001>
module attributes {stable_mosaic.version = 11 : i64} {
  func.func @_resident_embedding_kernel(%arg0: i32, %arg1: memref<16x1xi32, #tpu.memory_space<vmem>>, %arg2: memref<16x32xf32, #tpu.memory_space<vmem>>, %arg3: memref<8x32xf32, #tpu.memory_space<vmem>>, %arg4: memref<16x32xf32, #tpu.memory_space<vmem>>) attributes {dimension_semantics = [#tpu.dimension_semantics<parallel>], iteration_bounds = array<i64: 1>, scalar_prefetch = 0 : i64, scratch_operands = 0 : i64, tpu.core_type = #tpu.core_type<tc>, window_params = [{transform_indices = @transform_0, window_bounds = array<i64: 16, 1>}, {pipeline_mode = #tpu.pipeline_mode<synchronous>, transform_indices = @transform_1, window_bounds = array<i64: 16, 32>}, {pipeline_mode = #tpu.pipeline_mode<synchronous>, transform_indices = @transform_2, window_bounds = array<i64: 8, 32>}, {transform_indices = @transform_3, window_bounds = array<i64: 16, 32>}]} {
    %c0 = arith.constant 0 : index
    %c0_0 = arith.constant 0 : index
    %0 = vector.load %arg1[%c0, %c0_0] : memref<16x1xi32, #tpu.memory_space<vmem>>, vector<16x1xi32>
    %c0_i32 = arith.constant 0 : i32
    %c15_i32 = arith.constant 15 : i32
    %1 = vector.broadcast %c0_i32 : i32 to vector<16x1xi32>
    %2 = arith.maxsi %1, %0 : vector<16x1xi32>
    %3 = vector.broadcast %c15_i32 : i32 to vector<16x1xi32>
    %4 = arith.minsi %3, %2 : vector<16x1xi32>
    %5 = tpu.iota {dimensions = array<i32: 1>} : vector<16x16xi32>
    %6 = vector.broadcast %4 : vector<16x1xi32> to vector<16x16xi32>
    %7 = arith.cmpi eq, %5, %6 : vector<16x16xi32>
    %8 = arith.extui %7 : vector<16x16xi1> to vector<16x16xi32>
    %9 = arith.sitofp %8 : vector<16x16xi32> to vector<16x16xf32>
    %c0_1 = arith.constant 0 : index
    %c0_2 = arith.constant 0 : index
    %10 = vector.load %arg2[%c0_1, %c0_2] : memref<16x32xf32, #tpu.memory_space<vmem>>, vector<16x32xf32>
    %cst = arith.constant dense<0.000000e+00> : vector<16x32xf32>
    %11 = tpu.matmul %9, %10, %cst {dimension_numbers = #tpu.dot_dimension_numbers<[1], [0], [0], [1], [0, 0, 1, 1], [], []>} : vector<16x16xf32>, vector<16x32xf32>, vector<16x32xf32> -> vector<16x32xf32>
    %c0_3 = arith.constant 0 : index
    %c0_4 = arith.constant 0 : index
    %12 = vector.load %arg3[%c0_3, %c0_4] : memref<8x32xf32, #tpu.memory_space<vmem>>, vector<8x32xf32>
    %13 = vector.extract_strided_slice %11 {offsets = [0, 0], sizes = [8, 32], strides = [1, 1]} : vector<16x32xf32> to vector<8x32xf32>
    %14 = arith.addf %13, %12 : vector<8x32xf32>
    %c0_5 = arith.constant 0 : index
    %c0_6 = arith.constant 0 : index
    %15 = vector.load %arg4[%c0_5, %c0_6] : memref<16x32xf32, #tpu.memory_space<vmem>>, vector<8x32xf32>
    tpu.vector_store %arg4[%c0_5, %c0_6], %14 {strides = array<i32>} : memref<16x32xf32, #tpu.memory_space<vmem>>, vector<8x32xf32>,
    %16 = vector.extract_strided_slice %11 {offsets = [8, 0], sizes = [8, 32], strides = [1, 1]} : vector<16x32xf32> to vector<8x32xf32>
    %17 = arith.addf %16, %12 : vector<8x32xf32>
    %c8 = arith.constant 8 : index
    %c0_7 = arith.constant 0 : index
    %18 = vector.load %arg4[%c8, %c0_7] : memref<16x32xf32, #tpu.memory_space<vmem>>, vector<8x32xf32>
    tpu.vector_store %arg4[%c8, %c0_7], %17 {strides = array<i32>} : memref<16x32xf32, #tpu.memory_space<vmem>>, vector<8x32xf32>,
    return
  }
  func.func @transform_0(%arg0: i32) -> (i32, i32) {
    %c0_i32 = arith.constant 0 : i32
    %c0_i32_0 = arith.constant 0 : i32
    return %arg0, %c0_i32 : i32, i32
  }
  func.func @transform_1(%arg0: i32) -> (i32, i32) {
    %c0_i32 = arith.constant 0 : i32
    %c0_i32_0 = arith.constant 0 : i32
    %c0_i32_1 = arith.constant 0 : i32
    return %c0_i32, %c0_i32_0 : i32, i32
  }
  func.func @transform_2(%arg0: i32) -> (i32, i32) {
    %c0_i32 = arith.constant 0 : i32
    %c0_i32_0 = arith.constant 0 : i32
    %c0_i32_1 = arith.constant 0 : i32
    return %c0_i32, %c0_i32_0 : i32, i32
  }
  func.func @transform_3(%arg0: i32) -> (i32, i32) {
    %c0_i32 = arith.constant 0 : i32
    %c0_i32_0 = arith.constant 0 : i32
    return %arg0, %c0_i32 : i32, i32
  }
}

</mosaic_0001>

<llo_original>
// kernel: tpu_custom_call.1
$region0: #{tpu_custom_call.1}
  #allocation0 [shape = 'u32[]', space=smem, size = 0x4, offset = 0x4, fixed_abs, tag = 'smem constant byte address 0x4 - core index']
  #allocation1 [shape = 'u32[144,128]{1,0:T(1,128)}', space=vmem, size = 0x12000, scoped, tag = 'internal scratch']
  %s0 = inlined_call_operand.vmem [shape: s32[16,1], index: 0, kind: input, shape index: {}]
  %s1 = inlined_call_operand.vmem [shape: f32[16,32], index: 1, kind: input, shape index: {}]
  %s2 = inlined_call_operand.vmem [shape: f32[8,32], index: 2, kind: input, shape index: {}]
  %s3 = inlined_call_operand.hbm [shape: f32[16,32], index: 3, kind: output, shape index: {}]
  %s4 = sld [smem:[#allocation0]]
  $region22: #{tpu_custom_call.1} parent=0
    _
  %s6 = ssub.s32 1, %s4
  %s7 = scalar_select 0, %s6, %s4
  $region1: #{tpu_custom_call.1} parent=0
    #allocation2 [shape = 'u8[8192]{0}', space=vmem, size = 0x2000, scoped, tag = 'output window, operand 0, single buffered']
    #allocation3 [shape = 's32[1]{0}', space=sflag, size = 0x4, scoped, tag = 'scoped memory for tpu_custom_call.1']
    %8 = vsyncpa [#allocation3], 0
    // Predicated region
    $region2: #{tpu_custom_call.1} parent=1 // pred_check
      _
    $region3: #{tpu_custom_call.1} parent=1 // pred_check_branch
      %10 = sbr.rel (0) target = $region5
    $region4: #{tpu_custom_call.1} parent=1 // pred_region
      _
    $region5: #{tpu_custom_call.1} parent=1 // pred_fallthru
      _
    // Predicated region
    $region6: #{tpu_custom_call.1} parent=1 // pred_check
      _
    $region7: #{tpu_custom_call.1} parent=1 // pred_check_branch
      %12 = sbr.rel (0) target = $region9
    $region8: #{tpu_custom_call.1} parent=1 // pred_region
      _
    $region9: #{tpu_custom_call.1} parent=1 // pred_fallthru
      _
    // Predicated region
    $region10: #{tpu_custom_call.1} parent=1 // pred_check
      _
    $region11: #{tpu_custom_call.1} parent=1 // pred_check_branch
      %14 = sbr.rel (0) target = $region13
    $region12: #{tpu_custom_call.1} parent=1 // pred_region
      _
    $region13: #{tpu_custom_call.1} parent=1 // pred_fallthru
      _
    %v15 = vld [vmem:[%s0] sm:$0xff]
    %v16 = vld [vmem:[%s0 + $0x8] sm:$0xff]
    %vm17 = vcmp.gt.s32.totalorder %v15, 0
    %v18 = vsel %vm17, %v15, 0
    %vm19 = vcmp.gt.s32.totalorder %v16, 0
    %v20 = vsel %vm19, %v16, 0
    %vm21 = vcmp.lt.s32.totalorder %v18, 15
    %v22 = vsel %vm21, %v18, 15
    %vm23 = vcmp.lt.s32.totalorder %v20, 15
    %v24 = vsel %vm23, %v20, 15
    %v25 = vlaneseq
    %v26 = vand.u32 %v25, 127
    %27 = vset.pattern.permute.xlu0 0
    %28 = vperm.xlu0 %27, %v22
    %v29 = vpop.permute.xlu0 %28
    %30 = vset.pattern.permute.xlu0 0
    %31 = vperm.xlu0 %30, %v24
    %v32 = vpop.permute.xlu0 %31
    %vm33 = vcmp.eq.s32.totalorder %v26, %v29
    %vm34 = vcmp.eq.s32.totalorder %v26, %v32
    %v35 = vsel %vm33, 1, 0
    %v36 = vsel %vm34, 1, 0
    %v37 = vcvt.s32.f32 %v35
    %v38 = vcvt.s32.f32 %v36
    %v39 = vld [vmem:[%s1] sm:$0xff]
    %v40 = vld [vmem:[%s1 + $0x8] sm:$0xff]
    %vm41 = vcmask 130048
    %v43 = vsel %vm41, %v37, 0
    %v46 = vsel %vm41, %v38, 0
    %48 = vmatprep.subr.mxu0 0.0
    %49 = vmatpush1.msra.mxu0 %v39
    %50 = vmatprep.subr.mxu0 0.0
    %51 = vmatpush1.msra.mxu0 %v40
    %52 = vmatprep.subr.mxu0 0.0
    %53 = vmatpush1.msra.mxu0 0.0
    %54 = vmatprep.subr.mxu0 0.0
    %55 = vmatpush1.msra.mxu0 0.0
    %56 = vmatprep.subr.mxu0 0.0
    %57 = vmatpush1.msra.mxu0 0.0
    %58 = vmatprep.subr.mxu0 0.0
    %59 = vmatpush1.msra.mxu0 0.0
    %60 = vmatprep.subr.mxu0 0.0
    %61 = vmatpush1.msra.mxu0 0.0
    %62 = vmatprep.subr.mxu0 0.0
    %63 = vmatpush1.msra.mxu0 0.0
    %64 = vmatprep.subr.mxu0 0.0
    %65 = vmatpush1.msra.mxu0 0.0
    %66 = vmatprep.subr.mxu0 0.0
    %67 = vmatpush1.msra.mxu0 0.0
    %68 = vmatprep.subr.mxu0 0.0
    %69 = vmatpush1.msra.mxu0 0.0
    %70 = vmatprep.subr.mxu0 0.0
    %71 = vmatpush1.msra.mxu0 0.0
    %72 = vmatprep.subr.mxu0 0.0
    %73 = vmatpush1.msra.mxu0 0.0
    %74 = vmatprep.subr.mxu0 0.0
    %75 = vmatpush1.msra.mxu0 0.0
    %76 = vmatprep.subr.mxu0 0.0
    %77 = vmatpush1.msra.mxu0 0.0
    %78 = vmatprep.subr.mxu0 0.0
    %79 = vmatpush1.msra.mxu0 0.0
    %80 = vmatprep.subr.mxu0 0.0
    %81 = vmatpush1.msra.mxu0 0.0
    %82 = vmatprep.subr.mxu0 0.0
    %83 = vmatpush1.msra.mxu0 0.0
    %84 = vmatprep.subr.mxu0 0.0
    %85 = vmatpush1.msra.mxu0 0.0
    %86 = vmatprep.subr.mxu0 0.0
    %87 = vmatpush1.msra.mxu0 0.0
    %88 = vmatprep.subr.mxu0 0.0
    %89 = vmatpush1.msra.mxu0 0.0
    %90 = vmatprep.subr.mxu0 0.0
    %91 = vmatpush1.msra.mxu0 0.0
    %92 = vmatprep.subr.mxu0 0.0
    %93 = vmatpush1.msra.mxu0 0.0
    %94 = vmatprep.subr.mxu0 0.0
    %95 = vmatpush1.msra.mxu0 0.0
    %96 = vmatprep.subr.mxu0 0.0
    %97 = vmatpush1.msra.mxu0 0.0
    %98 = vmatprep.subr.mxu0 0.0
    %99 = vmatpush1.msra.mxu0 0.0
    %100 = vmatprep.subr.mxu0 0.0
    %101 = vmatpush1.msra.mxu0 0.0
    %102 = vmatprep.subr.mxu0 0.0
    %103 = vmatpush1.msra.mxu0 0.0
    %104 = vmatprep.subr.mxu0 0.0
    %105 = vmatpush1.msra.mxu0 0.0
    %106 = vmatprep.subr.mxu0 0.0
    %107 = vmatpush1.msra.mxu0 0.0
    %108 = vmatprep.subr.mxu0 0.0
    %109 = vmatpush1.msra.mxu0 0.0
    %110 = vmatprep.subr.mxu0 0.0
    %111 = vmatpush1.msra.mxu0 0.0
    %112 = vmatprep.mubr.f32.mxu0 0.0
    %113 = vmatmul.mubr.f32.gmra.mrb[0].mxu0 %v43
    %v114 = vpop.f32.mrb[0].mxu0
    %v115 = vadd.f32 0.0, %v114
    %v116 = vpop.f32.mrb[0].mxu0
    %117 = vmatprep.mubr.f32.mxu0 0.0
    %118 = vmatmul.mubr.f32.gmra.mrb[0].mxu0 %v46
    %v119 = vpop.f32.mrb[0].mxu0
    %v120 = vadd.f32 0.0, %v119
    %v121 = vpop.f32.mrb[0].mxu0
    %122 = vdwg.mxu0
    %v123 = vld [vmem:[%s2] sm:$0xff]
    %v124 = vadd.f32 %v115, %v123
    %vm125 = vcmask 261120
    %126 = vst.msk [vmem:[#allocation2] sm:$0xff] %vm125, %v124
    %v127 = vadd.f32 %v120, %v123
    %128 = vst.msk [vmem:[#allocation2 + $0x8] sm:$0xff] %vm125, %v127
    // Predicated region
    $region14: #{tpu_custom_call.1} parent=1 // pred_check
      _
    $region15: #{tpu_custom_call.1} parent=1 // pred_check_branch
      %130 = sbr.rel (0) target = $region17
    $region16: #{tpu_custom_call.1} parent=1 // pred_region
      %s132 = ssub.s32 256, 256
      %133 = vsyncadd [#allocation3], %s132
      %s134 = sshll.u32 [#allocation2], 4
      %s135 = int_to_ptr.vmem [resolvable:$true] %s134
      %140 = dma.vmem_to_hbm [thread:$0]  %s135, 256, %s3, [#allocation3], 128, 128, 8
    $region17: #{tpu_custom_call.1} parent=1 // pred_fallthru
      _
    // Predicated region
    $region18: #{tpu_custom_call.1} parent=1 // pred_check
      _
    $region19: #{tpu_custom_call.1} parent=1 // pred_check_branch
      %142 = sbr.rel (0) target = $region21
    $region20: #{tpu_custom_call.1} parent=1 // pred_region
      %143 = dma.done [#allocation3], 256
    $region21: #{tpu_custom_call.1} parent=1 // pred_fallthru
      _
    %144 = vsyncpa [#allocation3], 1

</llo_original>
